<compile_context>
chip_gen: v7x
topology: tpu7x:2x2x1
jax: 0.10.0
libtpu: 0.0.40
codegen_flags: <defaults>
</compile_context>

<pallas_src>
import functools

import jax
import jax.numpy as jnp
from jax import lax
from jax.experimental import pallas as pl
from jax.experimental.pallas import tpu as pltpu


# ---------------------------------------------------------------------------
# Kernels
# ---------------------------------------------------------------------------

def edge_node_embed_general_kernel(nfw_ref, adj_ref, norm_ref,
                                   w1_adj_ref, w2_top_ref, w2_last_ref,
                                   out_ref, *, chunk_n):
    """Arbitrary real edge weights.  Chunked accumulation over the neighbour
    axis keeps only a (Bblk, TI, F-1) accumulator live."""
    bblk, ti, n = adj_ref.shape
    fm1 = nfw_ref.shape[-1]
    f = w2_top_ref.shape[1]

    w1_adj = w1_adj_ref[...]                      # (1, F-1)
    norm = norm_ref[...]                          # (Bblk, TI, 1)

    def chunk_sum(adj_c, nfw_c):
        # adj_c: (Bblk, TI, cn)   nfw_c: (Bblk, cn, F-1)
        adj_e = adj_c[..., None]                  # (Bblk, TI, cn, 1)
        edge = jnp.where(adj_e != 0.0,
                         jnp.maximum(adj_e * w1_adj + nfw_c[:, None, :, :], 0.0),
                         0.0)                     # (Bblk, TI, cn, F-1)
        return jnp.sum(edge, axis=2)              # (Bblk, TI, F-1)

    n_chunks = n // chunk_n
    if n_chunks <= 1:
        acc = chunk_sum(adj_ref[...], nfw_ref[...])
    else:
        def body(c, acc):
            j0 = pl.multiple_of(c * chunk_n, chunk_n)
            adj_c = adj_ref[:, :, pl.ds(j0, chunk_n)]
            nfw_c = nfw_ref[:, pl.ds(j0, chunk_n), :]
            return acc + chunk_sum(adj_c, nfw_c)
        acc = lax.fori_loop(0, n_chunks, body,
                            jnp.zeros((bblk, ti, fm1), jnp.float32))

    embedded = acc * (1.0 / norm)                 # (Bblk, TI, F-1)
    pre = (jnp.dot(embedded.reshape(bblk * ti, fm1), w2_top_ref[...],
                   preferred_element_type=jnp.float32)
           + norm.reshape(bblk * ti, 1) * w2_last_ref[...])   # (Bblk*TI, F)
    out_ref[...] = jnp.maximum(pre, 0.0).reshape(bblk, ti, f)


def edge_node_embed_mxu_kernel(adj_ref, edge_ref, norm_ref,
                               w2_top_ref, w2_last_ref, out_ref):
    """Strictly 0/1 adjacency: neighbour sum == adj @ relu(nf_w + w1_adj)."""
    bblk, ti, n = adj_ref.shape
    fm1 = edge_ref.shape[-1]
    f = w2_top_ref.shape[1]

    norm = norm_ref[...]                          # (Bblk, TI, 1)
    emb = jnp.einsum('bin,bnf->bif', adj_ref[...], edge_ref[...],
                     preferred_element_type=jnp.float32)      # (Bblk, TI, F-1)
    emb = emb * (1.0 / norm)
    pre = (jnp.dot(emb.reshape(bblk * ti, fm1), w2_top_ref[...],
                   preferred_element_type=jnp.float32)
           + norm.reshape(bblk * ti, 1) * w2_last_ref[...])
    out_ref[...] = jnp.maximum(pre, 0.0).reshape(bblk, ti, f)


def edge_node_embed_mxu_posneg_kernel(adj_p_ref, adj_n_ref, edge_p_ref,
                                      edge_n_ref, norm_ref,
                                      w2_top_ref, w2_last_ref, out_ref):
    """Strictly {-1, 0, +1} adjacency: pos/neg two-matmul decomposition."""
    bblk, ti, n = adj_p_ref.shape
    fm1 = edge_p_ref.shape[-1]
    f = w2_top_ref.shape[1]

    norm = norm_ref[...]
    emb = (jnp.einsum('bin,bnf->bif', adj_p_ref[...], edge_p_ref[...],
                      preferred_element_type=jnp.float32)
           + jnp.einsum('bin,bnf->bif', adj_n_ref[...], edge_n_ref[...],
                        preferred_element_type=jnp.float32))  # (Bblk, TI, F-1)
    emb = emb * (1.0 / norm)
    pre = (jnp.dot(emb.reshape(bblk * ti, fm1), w2_top_ref[...],
                   preferred_element_type=jnp.float32)
           + norm.reshape(bblk * ti, 1) * w2_last_ref[...])
    out_ref[...] = jnp.maximum(pre, 0.0).reshape(bblk, ti, f)


# ---------------------------------------------------------------------------
# Tiling / VMEM heuristics
# ---------------------------------------------------------------------------

def _vmem_limit_bytes():
    try:
        cap = int(pltpu.get_tpu_info().vmem_capacity_bytes)
    except Exception:
        cap = 64 << 20      # assume the smallest generation (v7x) if unknown
    return max(32 << 20, min(int(cap * 0.6), 64 << 20))


def _choose_tiles(B, N, fm1, f, *, n_adj_inputs, vmem_budget):
    """Pick (bblk, ti): large TI first (MXU M-dim / per-step overhead / store
    density), then grow bblk, keeping >=2 total grid steps when possible."""
    def pad8(x):
        return -(-x // 8) * 8

    def pad128(x):
        return -(-x // 128) * 128

    def usage(bblk, ti):
        # Double-buffered, lane/sublane-padded block estimates (f32 = 4B).
        adj_blk = n_adj_inputs * 2 * bblk * pad8(ti) * pad128(N) * 4
        edge_blk = n_adj_inputs * 2 * bblk * pad8(N) * pad128(fm1) * 4
        norm_blk = 2 * bblk * pad8(ti) * 128 * 4
        out_blk = 2 * bblk * pad8(ti) * pad128(f) * 4
        w_blk = (pad8(fm1) * pad128(f) + 2 * 8 * pad128(max(fm1, f))) * 4
        return adj_blk + edge_blk + norm_blk + out_blk + w_blk

    ti_cands = sorted({d for d in range(8, N + 1, 8) if N % d == 0} | {N})
    pref = [d for d in ti_cands if d % 128 == 0 and usage(1, d) <= vmem_budget]
    if pref:
        ti = max(pref)
    else:
        fit = [d for d in ti_cands if usage(1, d) <= vmem_budget]
        ti = max(fit) if fit else min(ti_cands)

    bblk = 1
    for d in range(2, B + 1):
        if (B % d == 0 and usage(d, ti) <= vmem_budget
                and (B // d) * (N // ti) >= 2):
            bblk = d
    return bblk, ti


def _choose_chunk(N, bblk, ti, fm1, *, chunk_budget):
    """Largest divisor of N whose (bblk, ti, chunk, fm1) f32 intermediate fits
    the per-chunk budget.  Prefer lane-aligned (x128) chunks, then x8."""
    def nbytes(c):
        return bblk * ti * c * fm1 * 4

    if nbytes(N) <= chunk_budget:
        return N
    c128 = [d for d in range(128, N, 128) if N % d == 0 and nbytes(d) <= chunk_budget]
    if c128:
        return max(c128)
    c8 = [d for d in range(8, N, 8) if N % d == 0 and nbytes(d) <= chunk_budget]
    if c8:
        return max(c8)
    c_any = [d for d in range(8, N, 8) if N % d == 0]
    return min(c_any) if c_any else N


# ---------------------------------------------------------------------------
# Wrapper
# ---------------------------------------------------------------------------

def edge_and_node_embedding(node_features, adj, norm, w1, w2, *,
                            adj_mode="general",
                            matmul_dtype=None,
                            chunk_budget_bytes=256 << 10):
    """
    w1: (n_features-1, n_obs_in+1), w2: (n_features, n_features)  (PyTorch
    (out, in) layout, no bias).

    adj_mode:
      "general": arbitrary real edge weights  -> chunked VPU accumulation.
      "binary" : adjacency strictly in {0, 1} -> single MXU matmul.
      "signed" : adjacency strictly in {-1,0,1} -> pos/neg MXU decomposition.
    matmul_dtype: optional narrower dtype (e.g. jnp.bfloat16) for the MXU-path
      adjacency / edge-table operands (accumulation stays f32; loosens
      tolerance vs. an f32 reference).
    """
    node_features = jnp.asarray(node_features, jnp.float32)
    adj = jnp.asarray(adj, jnp.float32)
    norm = jnp.asarray(norm, jnp.float32)
    w1 = jnp.asarray(w1, jnp.float32)
    w2 = jnp.asarray(w2, jnp.float32)

    B, N, n_obs = node_features.shape
    fm1 = w1.shape[0]                      # n_features - 1
    f = fm1 + 1

    # Pre-split weights in (in, out) layout; resident in VMEM across the grid.
    w1_t = w1.T                            # (n_obs+1, F-1)
    w1_adj = w1_t[0:1, :]                  # (1, F-1)  adjacency-value column
    w1_nf = w1_t[1:, :]                    # (n_obs, F-1)
    w2_t = w2.T                            # (F, F)
    w2_top = w2_t[:fm1, :]                 # (F-1, F)
    # Fold 1/norm.max() into the last W2 row -> no scalar enters the kernel.
    w2_last = w2_t[fm1:, :] / jnp.max(norm)   # (1, F)

    # nf_w depends only on the source node j: hoist its matmul out of the
    # kernel so it is computed once (not once per i-tile) and the lane-padded
    # (.., n_obs) node_features block never enters the kernel.
    nf_w = jnp.einsum('bnd,df->bnf', node_features, w1_nf,
                      precision=jax.lax.Precision.HIGHEST)    # (B, N, F-1)

    n_adj_inputs = 2 if adj_mode == "signed" else 1
    bblk, ti = _choose_tiles(B, N, fm1, f, n_adj_inputs=n_adj_inputs,
                             vmem_budget=int(_vmem_limit_bytes() * 0.7))
    grid = (B // bblk, N // ti)

    w_specs = [
        pl.BlockSpec((fm1, f), lambda b, i: (0, 0)),          # w2_top
        pl.BlockSpec((1, f), lambda b, i: (0, 0)),            # w2_last (scaled)
    ]
    adj_spec = pl.BlockSpec((bblk, ti, N), lambda b, i: (b, i, 0))
    per_b_spec = pl.BlockSpec((bblk, N, fm1), lambda b, i: (b, 0, 0))
    norm_spec = pl.BlockSpec((bblk, ti, 1), lambda b, i: (b, i, 0))
    out_spec = pl.BlockSpec((bblk, ti, f), lambda b, i: (b, i, 0))

    if adj_mode == "general":
        chunk_n = _choose_chunk(N, bblk, ti, fm1, chunk_budget=chunk_budget_bytes)
        kernel = functools.partial(edge_node_embed_general_kernel,
                                   chunk_n=chunk_n)
        in_specs = [per_b_spec, adj_spec, norm_spec,
                    pl.BlockSpec((1, fm1), lambda b, i: (0, 0))] + w_specs
        operands = (nf_w, adj, norm, w1_adj, w2_top, w2_last)
    elif adj_mode == "binary":
        mm_dt = matmul_dtype or jnp.float32
        edge_pos = jax.nn.relu(nf_w + w1_adj)                 # (B, N, F-1)
        kernel = edge_node_embed_mxu_kernel
        in_specs = [adj_spec, per_b_spec, norm_spec] + w_specs
        operands = (adj.astype(mm_dt), edge_pos.astype(mm_dt),
                    norm, w2_top, w2_last)
    elif adj_mode == "signed":
        mm_dt = matmul_dtype or jnp.float32
        edge_pos = jax.nn.relu(nf_w + w1_adj)
        edge_neg = jax.nn.relu(nf_w - w1_adj)
        adj_pos = jnp.maximum(adj, 0.0)
        adj_neg = jnp.maximum(-adj, 0.0)
        kernel = edge_node_embed_mxu_posneg_kernel
        in_specs = [adj_spec, adj_spec, per_b_spec, per_b_spec,
                    norm_spec] + w_specs
        operands = (adj_pos.astype(mm_dt), adj_neg.astype(mm_dt),
                    edge_pos.astype(mm_dt), edge_neg.astype(mm_dt),
                    norm, w2_top, w2_last)
    else:
        raise ValueError(f"unknown adj_mode: {adj_mode!r}")

    grid_spec = pltpu.PrefetchScalarGridSpec(
        num_scalar_prefetch=0,
        grid=grid,
        in_specs=in_specs,
        out_specs=out_spec,
    )

    return pl.pallas_call(
        kernel,
        out_shape=jax.ShapeDtypeStruct((B, N, f), jnp.float32),
        grid_spec=grid_spec,
        compiler_params=pltpu.CompilerParams(
            dimension_semantics=("parallel", "parallel"),
            vmem_limit_bytes=_vmem_limit_bytes()),
    )(*operands)


# ---------------------------------------------------------------------------
# Pure-JAX reference (mirror of the PyTorch forward) and test
# ---------------------------------------------------------------------------

def reference_forward(node_features, adj, norm, w1, w2):
    B, N, n_obs = node_features.shape
    edge_features = jnp.concatenate(
        [adj[..., None],
         jnp.broadcast_to(node_features[:, None, :, :], (B, N, N, n_obs))],
        axis=-1)
    edge_features = edge_features * (adj[..., None] != 0).astype(jnp.float32)
    emb = jax.nn.relu(jnp.einsum('bijk,fk->bijf', edge_features, w1,
                                 precision=jax.lax.Precision.HIGHEST))
    emb = emb.sum(axis=2) / norm                              # (B, N, F-1)
    feat = jnp.concatenate([emb, norm / jnp.max(norm)], axis=-1)
    return jax.nn.relu(jnp.einsum('bif,gf->big', feat, w2,
                                  precision=jax.lax.Precision.HIGHEST))


if __name__ == "__main__":
    B, N = 2, 16
    n_obs_in, n_features = 4, 32

    key = jax.random.PRNGKey(0)
    k_nf, k_adj, k_wt, k_sgn, k_w1, k_w2 = jax.random.split(key, 6)

    node_features = jax.random.normal(k_nf, (B, N, n_obs_in), dtype=jnp.float32)

    # Symmetric 0/1 mask with empty diagonal; norm = degree (>= 1).
    m = (jax.random.uniform(k_adj, (B, N, N)) < 0.4).astype(jnp.float32)
    mask = jnp.triu(m, 1)
    mask = mask + jnp.swapaxes(mask, -1, -2)
    norm = jnp.maximum(mask.sum(axis=-1, keepdims=True), 1.0)   # (B, N, 1)

    # PyTorch nn.Linear-style uniform init, (out, in) layout, no bias.
    b1 = 1.0 / (n_obs_in + 1) ** 0.5
    w1 = jax.random.uniform(k_w1, (n_features - 1, n_obs_in + 1),
                            minval=-b1, maxval=b1, dtype=jnp.float32)
    b2 = 1.0 / n_features ** 0.5
    w2 = jax.random.uniform(k_w2, (n_features, n_features),
                            minval=-b2, maxval=b2, dtype=jnp.float32)

    def check(out, ref, name, rtol, atol):
        out = jax.block_until_ready(out)
        assert out.shape == ref.shape, (name, out.shape, ref.shape)
        err = float(jnp.max(jnp.abs(out - ref)))
        assert bool(jnp.allclose(out, ref, rtol=rtol, atol=atol)), (name, err)

    # 1) General path: arbitrary positive edge weights (chunked VPU path).
    wts = jax.random.uniform(k_wt, (B, N, N), minval=0.5, maxval=1.5)
    wts = jnp.triu(wts, 1)
    wts = wts + jnp.swapaxes(wts, -1, -2)
    adj_w = mask * wts
    ref_w = reference_forward(node_features, adj_w, norm, w1, w2)
    out_w = edge_and_node_embedding(node_features, adj_w, norm, w1, w2,
                                    adj_mode="general")
    check(out_w, ref_w, "general", rtol=1e-4, atol=5e-5)

    # 2) Binary 0/1 adjacency -> single-MXU-matmul path.
    ref_b = reference_forward(node_features, mask, norm, w1, w2)
    out_b = edge_and_node_embedding(node_features, mask, norm, w1, w2,
                                    adj_mode="binary")
    check(out_b, ref_b, "binary", rtol=1e-4, atol=5e-5)

    # 3) Signed {-1, 0, +1} adjacency -> pos/neg MXU decomposition.
    sgn = jnp.where(jax.random.uniform(k_sgn, (B, N, N)) < 0.5, -1.0, 1.0)
    sgn = jnp.triu(sgn, 1)
    sgn = sgn + jnp.swapaxes(sgn, -1, -2)
    adj_s = mask * sgn
    ref_s = reference_forward(node_features, adj_s, norm, w1, w2)
    out_s = edge_and_node_embedding(node_features, adj_s, norm, w1, w2,
                                    adj_mode="signed")
    check(out_s, ref_s, "signed", rtol=1e-4, atol=5e-5)

    # 4) Binary path with bf16 matmul operands (halves adj HBM traffic on
    #    v6e/v7x; accumulation stays f32, tolerance loosened accordingly).
    out_bf = edge_and_node_embedding(node_features, mask, norm, w1, w2,
                                     adj_mode="binary",
                                     matmul_dtype=jnp.bfloat16)
    check(out_bf, ref_b, "binary-bf16", rtol=5e-2, atol=5e-2)

    print("KERNEL_OK")
</pallas_src>

<mosaic_0001>
module attributes {stable_mosaic.version = 11 : i64} {
  func.func @edge_node_embed_general_kernel(%arg0: i32, %arg1: i32, %arg2: memref<1x16x31xf32, #tpu.memory_space<vmem>>, %arg3: memref<1x16x16xf32, #tpu.memory_space<vmem>>, %arg4: memref<1x16x1xf32, #tpu.memory_space<vmem>>, %arg5: memref<1x31xf32, #tpu.memory_space<vmem>>, %arg6: memref<31x32xf32, #tpu.memory_space<vmem>>, %arg7: memref<1x32xf32, #tpu.memory_space<vmem>>, %arg8: memref<1x16x32xf32, #tpu.memory_space<vmem>>) attributes {dimension_semantics = [#tpu.dimension_semantics<parallel>, #tpu.dimension_semantics<parallel>], iteration_bounds = array<i64: 2, 1>, scalar_prefetch = 0 : i64, scratch_operands = 0 : i64, tpu.core_type = #tpu.core_type<tc>, window_params = [{transform_indices = @transform_0, window_bounds = array<i64: 1, 16, 31>}, {transform_indices = @transform_1, window_bounds = array<i64: 1, 16, 16>}, {transform_indices = @transform_2, window_bounds = array<i64: 1, 16, 1>}, {pipeline_mode = #tpu.pipeline_mode<synchronous>, transform_indices = @transform_3, window_bounds = array<i64: 1, 31>}, {pipeline_mode = #tpu.pipeline_mode<synchronous>, transform_indices = @transform_4, window_bounds = array<i64: 31, 32>}, {pipeline_mode = #tpu.pipeline_mode<synchronous>, transform_indices = @transform_5, window_bounds = array<i64: 1, 32>}, {transform_indices = @transform_6, window_bounds = array<i64: 1, 16, 32>}]} {
    %c0 = arith.constant 0 : index
    %c0_0 = arith.constant 0 : index
    %0 = vector.load %arg5[%c0, %c0_0] : memref<1x31xf32, #tpu.memory_space<vmem>>, vector<1x31xf32>
    %c0_1 = arith.constant 0 : index
    %c0_2 = arith.constant 0 : index
    %c0_3 = arith.constant 0 : index
    %1 = vector.load %arg4[%c0_1, %c0_2, %c0_3] : memref<1x16x1xf32, #tpu.memory_space<vmem>>, vector<1x16x1xf32>
    %c0_4 = arith.constant 0 : index
    %c0_5 = arith.constant 0 : index
    %c0_6 = arith.constant 0 : index
    %2 = vector.load %arg3[%c0_4, %c0_5, %c0_6] : memref<1x16x16xf32, #tpu.memory_space<vmem>>, vector<1x16x16xf32>
    %c0_7 = arith.constant 0 : index
    %c0_8 = arith.constant 0 : index
    %c0_9 = arith.constant 0 : index
    %3 = vector.load %arg2[%c0_7, %c0_8, %c0_9] : memref<1x16x31xf32, #tpu.memory_space<vmem>>, vector<1x16x31xf32>
    %4 = vector.shape_cast %2 : vector<1x16x16xf32> to vector<1x16x16x1xf32>
    %cst = arith.constant 0.000000e+00 : f32
    %5 = vector.broadcast %cst : f32 to vector<1x16x16x1xf32>
    %6 = arith.cmpf one, %4, %5 : vector<1x16x16x1xf32>
    %7 = vector.shape_cast %0 : vector<1x31xf32> to vector<1x1x1x31xf32>
    %8 = vector.broadcast %4 : vector<1x16x16x1xf32> to vector<1x16x16x31xf32>
    %9 = vector.broadcast %7 : vector<1x1x1x31xf32> to vector<1x16x16x31xf32>
    %10 = arith.mulf %8, %9 : vector<1x16x16x31xf32>
    %11 = vector.shape_cast %3 : vector<1x16x31xf32> to vector<1x1x16x31xf32>
    %12 = vector.broadcast %11 : vector<1x1x16x31xf32> to vector<1x16x16x31xf32>
    %13 = arith.addf %10, %12 : vector<1x16x16x31xf32>
    %cst_10 = arith.constant 0.000000e+00 : f32
    %14 = vector.broadcast %cst_10 : f32 to vector<1x16x16x31xf32>
    %15 = arith.maximumf %13, %14 : vector<1x16x16x31xf32>
    %cst_11 = arith.constant 0.000000e+00 : f32
    %16 = vector.shape_cast %6 : vector<1x16x16x1xi1> to vector<1x16x16x1xi1>
    %17 = vector.broadcast %16 : vector<1x16x16x1xi1> to vector<1x16x16x31xi1>
    %18 = vector.broadcast %cst_11 : f32 to vector<1x16x16x31xf32>
    %19 = arith.select %17, %15, %18 : vector<1x16x16x31xi1>, vector<1x16x16x31xf32>
    %cst_12 = arith.constant dense<0.000000e+00> : vector<1x16x31xf32>
    %20 = vector.multi_reduction <add>, %19, %cst_12 [2] : vector<1x16x16x31xf32> to vector<1x16x31xf32>
    %cst_13 = arith.constant 1.000000e+00 : f32
    %21 = vector.broadcast %cst_13 : f32 to vector<1x16x1xf32>
    %22 = arith.divf %21, %1 : vector<1x16x1xf32>
    %23 = vector.broadcast %22 : vector<1x16x1xf32> to vector<1x16x31xf32>
    %24 = arith.mulf %20, %23 : vector<1x16x31xf32>
    %25 = vector.shape_cast %24 : vector<1x16x31xf32> to vector<16x31xf32>
    %c0_14 = arith.constant 0 : index
    %c0_15 = arith.constant 0 : index
    %26 = vector.load %arg6[%c0_14, %c0_15] : memref<31x32xf32, #tpu.memory_space<vmem>>, vector<31x32xf32>
    %cst_16 = arith.constant dense<0.000000e+00> : vector<16x32xf32>
    %27 = tpu.matmul %25, %26, %cst_16 {dimension_numbers = #tpu.dot_dimension_numbers<[1], [0], [0], [1], [0, 0, 1, 1], [], []>} : vector<16x31xf32>, vector<31x32xf32>, vector<16x32xf32> -> vector<16x32xf32>
    %28 = vector.shape_cast %1 : vector<1x16x1xf32> to vector<16x1xf32>
    %c0_17 = arith.constant 0 : index
    %c0_18 = arith.constant 0 : index
    %29 = vector.load %arg7[%c0_17, %c0_18] : memref<1x32xf32, #tpu.memory_space<vmem>>, vector<1x32xf32>
    %30 = vector.broadcast %28 : vector<16x1xf32> to vector<16x32xf32>
    %31 = vector.broadcast %29 : vector<1x32xf32> to vector<16x32xf32>
    %32 = arith.mulf %30, %31 : vector<16x32xf32>
    %33 = arith.addf %27, %32 : vector<16x32xf32>
    %cst_19 = arith.constant 0.000000e+00 : f32
    %34 = vector.broadcast %cst_19 : f32 to vector<16x32xf32>
    %35 = arith.maximumf %33, %34 : vector<16x32xf32>
    %36 = vector.shape_cast %35 : vector<16x32xf32> to vector<1x16x32xf32>
    %c0_20 = arith.constant 0 : index
    %c0_21 = arith.constant 0 : index
    %c0_22 = arith.constant 0 : index
    %37 = vector.load %arg8[%c0_20, %c0_21, %c0_22] : memref<1x16x32xf32, #tpu.memory_space<vmem>>, vector<1x16x32xf32>
    tpu.vector_store %arg8[%c0_20, %c0_21, %c0_22], %36 {strides = array<i32>} : memref<1x16x32xf32, #tpu.memory_space<vmem>>, vector<1x16x32xf32>,
    return
  }
  func.func @transform_0(%arg0: i32, %arg1: i32) -> (i32, i32, i32) {
    %c0_i32 = arith.constant 0 : i32
    %c0_i32_0 = arith.constant 0 : i32
    %c0_i32_1 = arith.constant 0 : i32
    return %arg0, %c0_i32, %c0_i32_0 : i32, i32, i32
  }
  func.func @transform_1(%arg0: i32, %arg1: i32) -> (i32, i32, i32) {
    %c0_i32 = arith.constant 0 : i32
    %c0_i32_0 = arith.constant 0 : i32
    return %arg0, %arg1, %c0_i32 : i32, i32, i32
  }
  func.func @transform_2(%arg0: i32, %arg1: i32) -> (i32, i32, i32) {
    %c0_i32 = arith.constant 0 : i32
    %c0_i32_0 = arith.constant 0 : i32
    return %arg0, %arg1, %c0_i32 : i32, i32, i32
  }
  func.func @transform_3(%arg0: i32, %arg1: i32) -> (i32, i32) {
    %c0_i32 = arith.constant 0 : i32
    %c0_i32_0 = arith.constant 0 : i32
    %c0_i32_1 = arith.constant 0 : i32
    return %c0_i32, %c0_i32_0 : i32, i32
  }
  func.func @transform_4(%arg0: i32, %arg1: i32) -> (i32, i32) {
    %c0_i32 = arith.constant 0 : i32
    %c0_i32_0 = arith.constant 0 : i32
    %c0_i32_1 = arith.constant 0 : i32
    return %c0_i32, %c0_i32_0 : i32, i32
  }
  func.func @transform_5(%arg0: i32, %arg1: i32) -> (i32, i32) {
    %c0_i32 = arith.constant 0 : i32
    %c0_i32_0 = arith.constant 0 : i32
    %c0_i32_1 = arith.constant 0 : i32
    return %c0_i32, %c0_i32_0 : i32, i32
  }
  func.func @transform_6(%arg0: i32, %arg1: i32) -> (i32, i32, i32) {
    %c0_i32 = arith.constant 0 : i32
    %c0_i32_0 = arith.constant 0 : i32
    return %arg0, %arg1, %c0_i32 : i32, i32, i32
  }
}

</mosaic_0001>

<llo_original>
// kernel: tpu_custom_call.1
$region0: #{tpu_custom_call.1}
  #allocation0 [shape = 'u32[]', space=smem, size = 0x4, offset = 0x4, fixed_abs, tag = 'smem constant byte address 0x4 - core index']
  #allocation1 [shape = 'u32[144,128]{1,0:T(1,128)}', space=vmem, size = 0x12000, scoped, tag = 'internal scratch']
  %s0 = inlined_call_operand.vmem [shape: f32[2,16,31], index: 0, kind: input, shape index: {}]
  %s1 = inlined_call_operand.hbm [shape: f32[2,16,16], index: 1, kind: input, shape index: {}]
  %s2 = inlined_call_operand.vmem [shape: f32[2,16,1], index: 2, kind: input, shape index: {}]
  %s3 = inlined_call_operand.vmem [shape: f32[1,31], index: 3, kind: input, shape index: {}]
  %s4 = inlined_call_operand.hbm [shape: f32[31,32], index: 4, kind: input, shape index: {}]
  %s5 = inlined_call_operand.vmem [shape: f32[1,32], index: 5, kind: input, shape index: {}]
  %s6 = inlined_call_operand.hbm [shape: f32[2,16,32], index: 6, kind: output, shape index: {}]
  %s7 = sld [smem:[#allocation0]]
  $region65: #{tpu_custom_call.1} parent=0
    _
  %s9 = ssub.s32 1, %s7
  %s10 = scalar_select 0, %s9, %s7
  $region1: #{tpu_custom_call.1} parent=0
    #allocation2 [shape = 'u8[16384]{0}', space=vmem, size = 0x4000, scoped, tag = 'input window, operand 1']
    #allocation3 [shape = 's32[2]{0}', space=sflag, size = 0x8, scoped, tag = 'scoped memory for tpu_custom_call.1']
    #allocation4 [shape = 's32[2]{0}', space=sflag, size = 0x8, scoped, tag = 'scoped memory for tpu_custom_call.1']
    #allocation5 [shape = 'u8[16384]{0}', space=vmem, size = 0x4000, scoped, tag = 'input window, operand 4, single buffered']
    #allocation6 [shape = 's32[1]{0}', space=sflag, size = 0x4, scoped, tag = 'scoped memory for tpu_custom_call.1']
    #allocation7 [shape = 'u8[16384]{0}', space=vmem, size = 0x4000, scoped, tag = 'output window, operand 0']
    %11 = vsyncpa [#allocation3], 0
    %s12 = scalar_lea.sflag [#allocation3], 1
    %13 = vsyncpa %s12, 0
    %14 = vsyncpa [#allocation6], 0
    %15 = vsyncpa [#allocation4], 0
    %s16 = scalar_lea.sflag [#allocation4], 1
    %17 = vsyncpa %s16, 0
    loop: start=0, step=1, limit=4
    $region2: #{tpu_custom_call.1} parent=1 // loop_pre_header
      _
    $region3: #{tpu_custom_call.1} parent=1 // loop_header
      %s19 = sphi 0, %s23
      %p20 = scmp.ge.s32.totalorder %s19, 4
      %s26 = sphi 0, %s38
      %s27 = sphi 0, %s34
      %s28 = sphi 0, %s26
      %s29 = sphi 0, %s27
      %s30 = sphi 0, %s28
      %s31 = sphi 0, %s29
      %s41 = sphi 0, %s43
      %s44 = sphi 0, %s41
      %s45 = sphi 0, %s44
      %s61 = sphi 0, %s45
      %s69 = sphi 0, %s71
      %s72 = sphi 0, %s69
      %s73 = sphi 0, %s72
      %s89 = sphi 0, %s73
      %s97 = sphi 0, %s99
      %s100 = sphi 0, %s97
      %s101 = sphi 0, %s100
      %s117 = sphi 0, %s101
      %s121 = sphi 0, %s121
      %s123 = sphi 0, %s121
      %s124 = sphi 0, %s123
      %s138 = sphi 0, %s124
      %s142 = sphi 0, %s142
      %s144 = sphi 0, %s142
      %s145 = sphi 0, %s144
      %s159 = sphi 0, %s145
      %s163 = sphi 0, %s163
      %s165 = sphi 0, %s163
      %s166 = sphi 0, %s165
      %s180 = sphi 0, %s166
      %s188 = sphi 0, %s190
      %s191 = sphi 0, %s188
      %s192 = sphi 0, %s191
      %s208 = sphi 0, %s192
    $region4: #{tpu_custom_call.1} parent=1 // loop_header_branch
      %22 = sbr.rel (%p20) target = $region8
    $region5: #{tpu_custom_call.1} parent=1 // loop_body
      %s24 = ssub.s32 %s19, 1
      %s25 = ssub.s32 %s19, 2
      %s32 = sadd.s32 1, %s27
      %p33 = scmp.ge.s32.totalorder %s32, 1
      %s34 = scalar_select %p33, 0, %s32
      %s35 = sadd.s32 1, %s26
      %s36 = scalar_select %p33, %s35, %s26
      %p37 = scmp.ge.s32.totalorder %s36, 2
      %s38 = scalar_select %p37, 0, %s36
      %s39 = ssub.s32 %s26, %s38
      %p40 = scmp.eq.s32.totalorder %s39, 0
      %s42 = sadd.s32 %s41, 1
      %s43 = scalar_select %p40, %s41, %s42
      %p46 = pneg %p40
      %p47 = scmp.eq.s32.totalorder %s19, 1
      %p48 = por %p46, %p47
      %p49 = scmp.ne.s32.totalorder %s41, %s44
      %p50 = scmp.eq.s32.totalorder %s19, 0
      %p51 = por %p49, %p50
      %p52 = scmp.ne.s32.totalorder %s41, %s44
      %p53 = scmp.eq.s32.totalorder %s24, 1
      %p54 = por %p52, %p53
      %p55 = scmp.ne.s32.totalorder %s44, %s45
      %p56 = scmp.eq.s32.totalorder %s24, 0
      %p57 = por %p55, %p56
      %p58 = scmp.ne.s32.totalorder %s44, %s45
      %p59 = scmp.eq.s32.totalorder %s25, 1
      %p60 = por %p58, %p59
      %p62 = scmp.ne.s32.totalorder %s45, %s61
      %p63 = scmp.eq.s32.totalorder %s25, 0
      %p64 = por %p62, %p63
      %s65 = ssub.s32 %s26, %s38
      %s66 = ssub.s32 %s27, %s34
      %s67 = sor.u32 %s65, %s66
      %p68 = scmp.eq.s32.totalorder %s67, 0
      %s70 = sadd.s32 %s69, 1
      %s71 = scalar_select %p68, %s69, %s70
      %p74 = pneg %p68
      %p75 = scmp.eq.s32.totalorder %s19, 1
      %p76 = por %p74, %p75
      %p77 = scmp.ne.s32.totalorder %s69, %s72
      %p78 = scmp.eq.s32.totalorder %s19, 0
      %p79 = por %p77, %p78
      %p80 = scmp.ne.s32.totalorder %s69, %s72
      %p81 = scmp.eq.s32.totalorder %s24, 1
      %p82 = por %p80, %p81
      %p83 = scmp.ne.s32.totalorder %s72, %s73
      %p84 = scmp.eq.s32.totalorder %s24, 0
      %p85 = por %p83, %p84
      %p86 = scmp.ne.s32.totalorder %s72, %s73
      %p87 = scmp.eq.s32.totalorder %s25, 1
      %p88 = por %p86, %p87
      %p90 = scmp.ne.s32.totalorder %s73, %s89
      %p91 = scmp.eq.s32.totalorder %s25, 0
      %p92 = por %p90, %p91
      %s93 = ssub.s32 %s26, %s38
      %s94 = ssub.s32 %s27, %s34
      %s95 = sor.u32 %s93, %s94
      %p96 = scmp.eq.s32.totalorder %s95, 0
      %s98 = sadd.s32 %s97, 1
      %s99 = scalar_select %p96, %s97, %s98
      %p102 = pneg %p96
      %p103 = scmp.eq.s32.totalorder %s19, 1
      %p104 = por %p102, %p103
      %p105 = scmp.ne.s32.totalorder %s97, %s100
      %p106 = scmp.eq.s32.totalorder %s19, 0
      %p107 = por %p105, %p106
      %p108 = scmp.ne.s32.totalorder %s97, %s100
      %p109 = scmp.eq.s32.totalorder %s24, 1
      %p110 = por %p108, %p109
      %p111 = scmp.ne.s32.totalorder %s100, %s101
      %p112 = scmp.eq.s32.totalorder %s24, 0
      %p113 = por %p111, %p112
      %p114 = scmp.ne.s32.totalorder %s100, %s101
      %p115 = scmp.eq.s32.totalorder %s25, 1
      %p116 = por %p114, %p115
      %p118 = scmp.ne.s32.totalorder %s101, %s117
      %p119 = scmp.eq.s32.totalorder %s25, 0
      %p120 = por %p118, %p119
      %s122 = sadd.s32 %s121, 1
      %p125 = scmp.eq.s32.totalorder %s19, 1
      %p126 = scmp.ne.s32.totalorder %s121, %s123
      %p127 = scmp.eq.s32.totalorder %s19, 0
      %p128 = por %p126, %p127
      %p129 = scmp.ne.s32.totalorder %s121, %s123
      %p130 = scmp.eq.s32.totalorder %s24, 1
      %p131 = por %p129, %p130
      %p132 = scmp.ne.s32.totalorder %s123, %s124
      %p133 = scmp.eq.s32.totalorder %s24, 0
      %p134 = por %p132, %p133
      %p135 = scmp.ne.s32.totalorder %s123, %s124
      %p136 = scmp.eq.s32.totalorder %s25, 1
      %p137 = por %p135, %p136
      %p139 = scmp.ne.s32.totalorder %s124, %s138
      %p140 = scmp.eq.s32.totalorder %s25, 0
      %p141 = por %p139, %p140
      %s143 = sadd.s32 %s142, 1
      %p146 = scmp.eq.s32.totalorder %s19, 1
      %p147 = scmp.ne.s32.totalorder %s142, %s144
      %p148 = scmp.eq.s32.totalorder %s19, 0
      %p149 = por %p147, %p148
      %p150 = scmp.ne.s32.totalorder %s142, %s144
      %p151 = scmp.eq.s32.totalorder %s24, 1
      %p152 = por %p150, %p151
      %p153 = scmp.ne.s32.totalorder %s144, %s145
      %p154 = scmp.eq.s32.totalorder %s24, 0
      %p155 = por %p153, %p154
      %p156 = scmp.ne.s32.totalorder %s144, %s145
      %p157 = scmp.eq.s32.totalorder %s25, 1
      %p158 = por %p156, %p157
      %p160 = scmp.ne.s32.totalorder %s145, %s159
      %p161 = scmp.eq.s32.totalorder %s25, 0
      %p162 = por %p160, %p161
      %s164 = sadd.s32 %s163, 1
      %p167 = scmp.eq.s32.totalorder %s19, 1
      %p168 = scmp.ne.s32.totalorder %s163, %s165
      %p169 = scmp.eq.s32.totalorder %s19, 0
      %p170 = por %p168, %p169
      %p171 = scmp.ne.s32.totalorder %s163, %s165
      %p172 = scmp.eq.s32.totalorder %s24, 1
      %p173 = por %p171, %p172
      %p174 = scmp.ne.s32.totalorder %s165, %s166
      %p175 = scmp.eq.s32.totalorder %s24, 0
      %p176 = por %p174, %p175
      %p177 = scmp.ne.s32.totalorder %s165, %s166
      %p178 = scmp.eq.s32.totalorder %s25, 1
      %p179 = por %p177, %p178
      %p181 = scmp.ne.s32.totalorder %s166, %s180
      %p182 = scmp.eq.s32.totalorder %s25, 0
      %p183 = por %p181, %p182
      %s184 = ssub.s32 %s26, %s38
      %s185 = ssub.s32 %s27, %s34
      %s186 = sor.u32 %s184, %s185
      %p187 = scmp.eq.s32.totalorder %s186, 0
      %s189 = sadd.s32 %s188, 1
      %s190 = scalar_select %p187, %s188, %s189
      %p193 = pneg %p187
      %p194 = scmp.eq.s32.totalorder %s19, 1
      %p195 = por %p193, %p194
      %p196 = scmp.ne.s32.totalorder %s188, %s191
      %p197 = scmp.eq.s32.totalorder %s19, 0
      %p198 = por %p196, %p197
      %p199 = scmp.ne.s32.totalorder %s188, %s191
      %p200 = scmp.eq.s32.totalorder %s24, 1
      %p201 = por %p199, %p200
      %p202 = scmp.ne.s32.totalorder %s191, %s192
      %p203 = scmp.eq.s32.totalorder %s24, 0
      %p204 = por %p202, %p203
      %p205 = scmp.ne.s32.totalorder %s191, %s192
      %p206 = scmp.eq.s32.totalorder %s25, 1
      %p207 = por %p205, %p206
      %p209 = scmp.ne.s32.totalorder %s192, %s208
      %p210 = scmp.eq.s32.totalorder %s25, 0
      %p211 = por %p209, %p210
      %p212 = scmp.le.s32.totalorder 1, %s19
      %p213 = scmp.lt.s32.totalorder %s19, 3
      %p214 = pnand %p212, %p213
      %p215 = pneg %p214
      // Predicated region
      $region9: #{tpu_custom_call.1} parent=5 // pred_check
        _
      $region10: #{tpu_custom_call.1} parent=5 // pred_check_branch
        %217 = sbr.rel (%p214) target = $region12
      $region11: #{tpu_custom_call.1} parent=5 // pred_region
        %s218 = ssub.s32 %s19, 1
        // Predicated region
        $region13: #{tpu_custom_call.1} parent=11 // pred_check
          %p219 = pneg %p134
        $region14: #{tpu_custom_call.1} parent=11 // pred_check_branch
          %221 = sbr.rel (%p219) target = $region16
        $region15: #{tpu_custom_call.1} parent=11 // pred_region
          _
        $region16: #{tpu_custom_call.1} parent=11 // pred_fallthru
          _
        // Predicated region
        $region17: #{tpu_custom_call.1} parent=11 // pred_check
          %p222 = pneg %p155
        $region18: #{tpu_custom_call.1} parent=11 // pred_check_branch
          %224 = sbr.rel (%p222) target = $region20
        $region19: #{tpu_custom_call.1} parent=11 // pred_region
          %s226 = ssub.s32 512, 512
          %227 = vsyncadd [#allocation6], %s226
          %s228 = sshll.u32 [#allocation5], 4
          %s229 = int_to_ptr.vmem [resolvable:$true] %s228
          %234 = dma.hbm_to_vmem [thread:$0]  %s4, 512, %s229, [#allocation6], 128, 128, 8
        $region20: #{tpu_custom_call.1} parent=11 // pred_fallthru
          _
        // Predicated region
        $region21: #{tpu_custom_call.1} parent=11 // pred_check
          %p235 = pneg %p176
        $region22: #{tpu_custom_call.1} parent=11 // pred_check_branch
          %237 = sbr.rel (%p235) target = $region24
        $region23: #{tpu_custom_call.1} parent=11 // pred_region
          _
        $region24: #{tpu_custom_call.1} parent=11 // pred_fallthru
          _
      $region12: #{tpu_custom_call.1} parent=5 // pred_fallthru
        _
      %p238 = scmp.lt.s32.totalorder %s19, 2
      // Predicated region
      $region25: #{tpu_custom_call.1} parent=5 // pred_check
        %p239 = pneg %p238
      $region26: #{tpu_custom_call.1} parent=5 // pred_check_branch
        %241 = sbr.rel (%p239) target = $region28
      $region27: #{tpu_custom_call.1} parent=5 // pred_region
        // Predicated region
        $region29: #{tpu_custom_call.1} parent=27 // pred_check
          %p242 = pneg %p51
        $region30: #{tpu_custom_call.1} parent=27 // pred_check_branch
          %244 = sbr.rel (%p242) target = $region32
        $region31: #{tpu_custom_call.1} parent=27 // pred_region
          %p245 = scmp.lt.s32.totalorder %s26, 1
          %s246 = scalar_select %p245, %s26, 1
          %s247 = smul.addr %s246, 2
          %s248 = smul.addr %s247, 8
          %s249 = scalar_lea.vmem %s0, %s248
        $region32: #{tpu_custom_call.1} parent=27 // pred_fallthru
          _
        // Predicated region
        $region33: #{tpu_custom_call.1} parent=27 // pred_check
          %p250 = pneg %p79
        $region34: #{tpu_custom_call.1} parent=27 // pred_check_branch
          %252 = sbr.rel (%p250) target = $region36
        $region35: #{tpu_custom_call.1} parent=27 // pred_region
          %s253 = sand.u32 %s69, 1
          %s254 = scalar_lea.sflag [#allocation3], %s253
          %s255 = sand.u32 %s69, 1
          %s256 = smul.addr %s255, 16
          %s257 = scalar_lea.vmem [#allocation2], %s256
          %s258 = smul.u32 2, %s27
          %s260 = ssub.s32 256, 256
          %261 = vsyncadd %s254, %s260
          %s262 = smul.addr %s26, 2
          %s263 = sadd.s32 %s258, %s262
          %s264 = smul.addr %s263, 128
          %s265 = scalar_lea.hbm %s1, %s264
          %s266 = sshll.u32 %s257, 4
          %s267 = int_to_ptr.vmem [resolvable:$true] %s266
          %272 = dma.hbm_to_vmem [thread:$0]  %s265, 256, %s267, %s254, 128, 128, 8
        $region36: #{tpu_custom_call.1} parent=27 // pred_fallthru
          _
        // Predicated region
        $region37: #{tpu_custom_call.1} parent=27 // pred_check
          %p273 = pneg %p107
        $region38: #{tpu_custom_call.1} parent=27 // pred_check_branch
          %275 = sbr.rel (%p273) target = $region40
        $region39: #{tpu_custom_call.1} parent=27 // pred_region
          %s276 = smul.u32 2, %s27
          %p277 = scmp.lt.s32.totalorder %s26, 1
          %s278 = scalar_select %p277, %s26, 1
          %p279 = scmp.lt.s32.totalorder %s276, 1
          %s280 = scalar_select %p279, %s276, 1
          %s281 = smul.addr %s278, 2
          %s282 = sadd.s32 %s280, %s281
          %s283 = smul.addr %s282, 8
          %s284 = scalar_lea.vmem %s2, %s283
          %s285 = smul.u32 2, %s27
        $region40: #{tpu_custom_call.1} parent=27 // pred_fallthru
          _
      $region28: #{tpu_custom_call.1} parent=5 // pred_fallthru
        _
      %p286 = scmp.le.s32.totalorder 1, %s19
      %p287 = scmp.lt.s32.totalorder %s19, 3
      %p288 = pnand %p286, %p287
      %p289 = pneg %p288
      // Predicated region
      $region41: #{tpu_custom_call.1} parent=5 // pred_check
        _
      $region42: #{tpu_custom_call.1} parent=5 // pred_check_branch
        %291 = sbr.rel (%p288) target = $region44
      $region43: #{tpu_custom_call.1} parent=5 // pred_region
        %s292 = ssub.s32 %s19, 1
        %s293 = sand.u32 %s72, 1
        %s294 = scalar_lea.sflag [#allocation3], %s293
        %s295 = sand.u32 %s72, 1
        %s296 = smul.addr %s295, 16
        %s297 = scalar_lea.vmem [#allocation2], %s296
        // Predicated region
        $region45: #{tpu_custom_call.1} parent=43 // pred_check
          %p298 = pneg %p85
        $region46: #{tpu_custom_call.1} parent=43 // pred_check_branch
          %300 = sbr.rel (%p298) target = $region48
        $region47: #{tpu_custom_call.1} parent=43 // pred_region
          %301 = dma.done %s294, 256
        $region48: #{tpu_custom_call.1} parent=43 // pred_fallthru
          _
        // Predicated region
        $region49: #{tpu_custom_call.1} parent=43 // pred_check
          %p302 = pneg %p155
        $region50: #{tpu_custom_call.1} parent=43 // pred_check_branch
          %304 = sbr.rel (%p302) target = $region52
        $region51: #{tpu_custom_call.1} parent=43 // pred_region
          %305 = dma.done [#allocation6], 512
        $region52: #{tpu_custom_call.1} parent=43 // pred_fallthru
          _
        %p306 = scmp.lt.s32.totalorder %s28, 1
        %s307 = scalar_select %p306, %s28, 1
        %s308 = smul.addr %s307, 2
        %s309 = smul.addr %s308, 8
        %s310 = scalar_lea.vmem %s0, %s309
        %p311 = pneg %p57
        %p312 = pneg %p54
        %s313 = sand.u32 %s72, 1
        %s314 = scalar_lea.sflag [#allocation3], %s313
        %s315 = sand.u32 %s72, 1
        %s316 = smul.addr %s315, 16
        %s317 = scalar_lea.vmem [#allocation2], %s316
        %p318 = pneg %p85
        %p319 = pneg %p82
        %s320 = smul.u32 2, %s29
        %p321 = scmp.lt.s32.totalorder %s28, 1
        %s322 = scalar_select %p321, %s28, 1
        %p323 = scmp.lt.s32.totalorder %s320, 1
        %s324 = scalar_select %p323, %s320, 1
        %s325 = smul.addr %s322, 2
        %s326 = sadd.s32 %s324, %s325
        %s327 = smul.addr %s326, 8
        %s328 = scalar_lea.vmem %s2, %s327
        %p329 = pneg %p113
        %p330 = pneg %p110
        %p331 = pneg %p134
        %p332 = pneg %p131
        %p333 = pneg %p155
        %p334 = pneg %p152
        %p335 = pneg %p176
        %p336 = pneg %p173
        %p337 = pneg %p204
        %p338 = pneg %p201
        %s339 = sand.u32 %s191, 1
        %s340 = scalar_lea.sflag [#allocation4], %s339
        %s341 = sand.u32 %s191, 1
        %s342 = smul.addr %s341, 16
        %s343 = scalar_lea.vmem [#allocation7], %s342
        %p344 = scmp.lt.s32.totalorder %s28, 1
        %s345 = scalar_select %p344, %s28, 1
        %s346 = smul.addr %s345, 2
        %s347 = smul.addr %s346, 8
        %s348 = scalar_lea.vmem %s0, %s347
        %s349 = smul.u32 2, %s29
        %s350 = smul.u32 2, %s29
        %p351 = scmp.lt.s32.totalorder %s28, 1
        %s352 = scalar_select %p351, %s28, 1
        %p353 = scmp.lt.s32.totalorder %s350, 1
        %s354 = scalar_select %p353, %s350, 1
        %s355 = smul.addr %s352, 2
        %s356 = sadd.s32 %s354, %s355
        %s357 = smul.addr %s356, 8
        %s358 = scalar_lea.vmem %s2, %s357
        %s359 = smul.u32 2, %s29
        %s360 = smul.u32 2, %s29
        %v361 = vld [vmem:[%s3] sm:$0x1]
        %v362 = vld [vmem:[%s358] sm:$0xff]
        %v363 = vld [vmem:[%s358 + $0x8] sm:$0xff]
        %v364 = vld [vmem:[%s297] sm:$0xff]
        %v365 = vld [vmem:[%s297 + $0x8] sm:$0xff]
        %v366 = vld [vmem:[%s348] sm:$0xff]
        %v367 = vld [vmem:[%s348 + $0x8] sm:$0xff]
        %v368 = vlaneseq
        %v369 = vshrl.u32 %v368, 7
        %v370 = vsub.s32 0, %v369
        %v371 = vrot.slane %v364, %v370
        %373 = vbcast.lane.b32.xlu0 %v371, 256
        %v374 = vpop.permute.xlu0 %373
        %s376 = sor.u32 256, 8
        %377 = vbcast.lane.b32.xlu0 %v371, %s376
        %v378 = vpop.permute.xlu0 %377
        %v379 = vlaneseq
        %v380 = vshrl.u32 %v379, 7
        %v381 = vsub.s32 1, %v380
        %v382 = vrot.slane %v364, %v381
        %384 = vbcast.lane.b32.xlu0 %v382, 256
        %v385 = vpop.permute.xlu0 %384
        %s387 = sor.u32 256, 8
        %388 = vbcast.lane.b32.xlu0 %v382, %s387
        %v389 = vpop.permute.xlu0 %388
        %v390 = vlaneseq
        %v391 = vshrl.u32 %v390, 7
        %v392 = vsub.s32 2, %v391
        %v393 = vrot.slane %v364, %v392
        %395 = vbcast.lane.b32.xlu0 %v393, 256
        %v396 = vpop.permute.xlu0 %395
        %s398 = sor.u32 256, 8
        %399 = vbcast.lane.b32.xlu0 %v393, %s398
        %v400 = vpop.permute.xlu0 %399
        %v401 = vlaneseq
        %v402 = vshrl.u32 %v401, 7
        %v403 = vsub.s32 3, %v402
        %v404 = vrot.slane %v364, %v403
        %406 = vbcast.lane.b32.xlu0 %v404, 256
        %v407 = vpop.permute.xlu0 %406
        %s409 = sor.u32 256, 8
        %410 = vbcast.lane.b32.xlu0 %v404, %s409
        %v411 = vpop.permute.xlu0 %410
        %v412 = vlaneseq
        %v413 = vshrl.u32 %v412, 7
        %v414 = vsub.s32 4, %v413
        %v415 = vrot.slane %v364, %v414
        %417 = vbcast.lane.b32.xlu0 %v415, 256
        %v418 = vpop.permute.xlu0 %417
        %s420 = sor.u32 256, 8
        %421 = vbcast.lane.b32.xlu0 %v415, %s420
        %v422 = vpop.permute.xlu0 %421
        %v423 = vlaneseq
        %v424 = vshrl.u32 %v423, 7
        %v425 = vsub.s32 5, %v424
        %v426 = vrot.slane %v364, %v425
        %428 = vbcast.lane.b32.xlu0 %v426, 256
        %v429 = vpop.permute.xlu0 %428
        %s431 = sor.u32 256, 8
        %432 = vbcast.lane.b32.xlu0 %v426, %s431
        %v433 = vpop.permute.xlu0 %432
        %v434 = vlaneseq
        %v435 = vshrl.u32 %v434, 7
        %v436 = vsub.s32 6, %v435
        %v437 = vrot.slane %v364, %v436
        %439 = vbcast.lane.b32.xlu0 %v437, 256
        %v440 = vpop.permute.xlu0 %439
        %s442 = sor.u32 256, 8
        %443 = vbcast.lane.b32.xlu0 %v437, %s442
        %v444 = vpop.permute.xlu0 %443
        %v445 = vlaneseq
        %v446 = vshrl.u32 %v445, 7
        %v447 = vsub.s32 7, %v446
        %v448 = vrot.slane %v364, %v447
        %450 = vbcast.lane.b32.xlu0 %v448, 256
        %v451 = vpop.permute.xlu0 %450
        %s453 = sor.u32 256, 8
        %454 = vbcast.lane.b32.xlu0 %v448, %s453
        %v455 = vpop.permute.xlu0 %454
        %v456 = vlaneseq
        %v457 = vshrl.u32 %v456, 7
        %v458 = vsub.s32 0, %v457
        %v459 = vrot.slane %v365, %v458
        %461 = vbcast.lane.b32.xlu0 %v459, 256
        %v462 = vpop.permute.xlu0 %461
        %s464 = sor.u32 256, 8
        %465 = vbcast.lane.b32.xlu0 %v459, %s464
        %v466 = vpop.permute.xlu0 %465
        %v467 = vlaneseq
        %v468 = vshrl.u32 %v467, 7
        %v469 = vsub.s32 1, %v468
        %v470 = vrot.slane %v365, %v469
        %472 = vbcast.lane.b32.xlu0 %v470, 256
        %v473 = vpop.permute.xlu0 %472
        %s475 = sor.u32 256, 8
        %476 = vbcast.lane.b32.xlu0 %v470, %s475
        %v477 = vpop.permute.xlu0 %476
        %v478 = vlaneseq
        %v479 = vshrl.u32 %v478, 7
        %v480 = vsub.s32 2, %v479
        %v481 = vrot.slane %v365, %v480
        %483 = vbcast.lane.b32.xlu0 %v481, 256
        %v484 = vpop.permute.xlu0 %483
        %s486 = sor.u32 256, 8
        %487 = vbcast.lane.b32.xlu0 %v481, %s486
        %v488 = vpop.permute.xlu0 %487
        %v489 = vlaneseq
        %v490 = vshrl.u32 %v489, 7
        %v491 = vsub.s32 3, %v490
        %v492 = vrot.slane %v365, %v491
        %494 = vbcast.lane.b32.xlu0 %v492, 256
        %v495 = vpop.permute.xlu0 %494
        %s497 = sor.u32 256, 8
        %498 = vbcast.lane.b32.xlu0 %v492, %s497
        %v499 = vpop.permute.xlu0 %498
        %v500 = vlaneseq
        %v501 = vshrl.u32 %v500, 7
        %v502 = vsub.s32 4, %v501
        %v503 = vrot.slane %v365, %v502
        %505 = vbcast.lane.b32.xlu0 %v503, 256
        %v506 = vpop.permute.xlu0 %505
        %s508 = sor.u32 256, 8
        %509 = vbcast.lane.b32.xlu0 %v503, %s508
        %v510 = vpop.permute.xlu0 %509
        %v511 = vlaneseq
        %v512 = vshrl.u32 %v511, 7
        %v513 = vsub.s32 5, %v512
        %v514 = vrot.slane %v365, %v513
        %516 = vbcast.lane.b32.xlu0 %v514, 256
        %v517 = vpop.permute.xlu0 %516
        %s519 = sor.u32 256, 8
        %520 = vbcast.lane.b32.xlu0 %v514, %s519
        %v521 = vpop.permute.xlu0 %520
        %v522 = vlaneseq
        %v523 = vshrl.u32 %v522, 7
        %v524 = vsub.s32 6, %v523
        %v525 = vrot.slane %v365, %v524
        %527 = vbcast.lane.b32.xlu0 %v525, 256
        %v528 = vpop.permute.xlu0 %527
        %s530 = sor.u32 256, 8
        %531 = vbcast.lane.b32.xlu0 %v525, %s530
        %v532 = vpop.permute.xlu0 %531
        %v533 = vlaneseq
        %v534 = vshrl.u32 %v533, 7
        %v535 = vsub.s32 7, %v534
        %v536 = vrot.slane %v365, %v535
        %538 = vbcast.lane.b32.xlu0 %v536, 256
        %v539 = vpop.permute.xlu0 %538
        %s541 = sor.u32 256, 8
        %542 = vbcast.lane.b32.xlu0 %v536, %s541
        %v543 = vpop.permute.xlu0 %542
        %vm544 = vcmp.ne.f32.partialorder %v374, 0.0
        %vm545 = vcmp.ne.f32.partialorder %v378, 0.0
        %vm546 = vcmp.ne.f32.partialorder %v385, 0.0
        %vm547 = vcmp.ne.f32.partialorder %v389, 0.0
        %vm548 = vcmp.ne.f32.partialorder %v396, 0.0
        %vm549 = vcmp.ne.f32.partialorder %v400, 0.0
        %vm550 = vcmp.ne.f32.partialorder %v407, 0.0
        %vm551 = vcmp.ne.f32.partialorder %v411, 0.0
        %vm552 = vcmp.ne.f32.partialorder %v418, 0.0
        %vm553 = vcmp.ne.f32.partialorder %v422, 0.0
        %vm554 = vcmp.ne.f32.partialorder %v429, 0.0
        %vm555 = vcmp.ne.f32.partialorder %v433, 0.0
        %vm556 = vcmp.ne.f32.partialorder %v440, 0.0
        %vm557 = vcmp.ne.f32.partialorder %v444, 0.0
        %vm558 = vcmp.ne.f32.partialorder %v451, 0.0
        %vm559 = vcmp.ne.f32.partialorder %v455, 0.0
        %vm560 = vcmp.ne.f32.partialorder %v462, 0.0
        %vm561 = vcmp.ne.f32.partialorder %v466, 0.0
        %vm562 = vcmp.ne.f32.partialorder %v473, 0.0
        %vm563 = vcmp.ne.f32.partialorder %v477, 0.0
        %vm564 = vcmp.ne.f32.partialorder %v484, 0.0
        %vm565 = vcmp.ne.f32.partialorder %v488, 0.0
        %vm566 = vcmp.ne.f32.partialorder %v495, 0.0
        %vm567 = vcmp.ne.f32.partialorder %v499, 0.0
        %vm568 = vcmp.ne.f32.partialorder %v506, 0.0
        %vm569 = vcmp.ne.f32.partialorder %v510, 0.0
        %vm570 = vcmp.ne.f32.partialorder %v517, 0.0
        %vm571 = vcmp.ne.f32.partialorder %v521, 0.0
        %vm572 = vcmp.ne.f32.partialorder %v528, 0.0
        %vm573 = vcmp.ne.f32.partialorder %v532, 0.0
        %vm574 = vcmp.ne.f32.partialorder %v539, 0.0
        %vm575 = vcmp.ne.f32.partialorder %v543, 0.0
        %v577 = vlaneseq
        %v578 = vshrl.u32 %v577, 7
        %v579 = vsub.s32 0, %v578
        %v580 = vrot.slane %v361, %v579
        %v582 = vmul.f32 %v374, %v580
        %v583 = vmul.f32 %v378, %v580
        %v584 = vmul.f32 %v385, %v580
        %v585 = vmul.f32 %v389, %v580
        %v586 = vmul.f32 %v396, %v580
        %v587 = vmul.f32 %v400, %v580
        %v588 = vmul.f32 %v407, %v580
        %v589 = vmul.f32 %v411, %v580
        %v590 = vmul.f32 %v418, %v580
        %v591 = vmul.f32 %v422, %v580
        %v592 = vmul.f32 %v429, %v580
        %v593 = vmul.f32 %v433, %v580
        %v594 = vmul.f32 %v440, %v580
        %v595 = vmul.f32 %v444, %v580
        %v596 = vmul.f32 %v451, %v580
        %v597 = vmul.f32 %v455, %v580
        %v598 = vmul.f32 %v462, %v580
        %v599 = vmul.f32 %v466, %v580
        %v600 = vmul.f32 %v473, %v580
        %v601 = vmul.f32 %v477, %v580
        %v602 = vmul.f32 %v484, %v580
        %v603 = vmul.f32 %v488, %v580
        %v604 = vmul.f32 %v495, %v580
        %v605 = vmul.f32 %v499, %v580
        %v606 = vmul.f32 %v506, %v580
        %v607 = vmul.f32 %v510, %v580
        %v608 = vmul.f32 %v517, %v580
        %v609 = vmul.f32 %v521, %v580
        %v610 = vmul.f32 %v528, %v580
        %v611 = vmul.f32 %v532, %v580
        %v612 = vmul.f32 %v539, %v580
        %v613 = vmul.f32 %v543, %v580
        %v614 = vadd.f32 %v582, %v366
        %v615 = vadd.f32 %v583, %v367
        %v616 = vadd.f32 %v584, %v366
        %v617 = vadd.f32 %v585, %v367
        %v618 = vadd.f32 %v586, %v366
        %v619 = vadd.f32 %v587, %v367
        %v620 = vadd.f32 %v588, %v366
        %v621 = vadd.f32 %v589, %v367
        %v622 = vadd.f32 %v590, %v366
        %v623 = vadd.f32 %v591, %v367
        %v624 = vadd.f32 %v592, %v366
        %v625 = vadd.f32 %v593, %v367
        %v626 = vadd.f32 %v594, %v366
        %v627 = vadd.f32 %v595, %v367
        %v628 = vadd.f32 %v596, %v366
        %v629 = vadd.f32 %v597, %v367
        %v630 = vadd.f32 %v598, %v366
        %v631 = vadd.f32 %v599, %v367
        %v632 = vadd.f32 %v600, %v366
        %v633 = vadd.f32 %v601, %v367
        %v634 = vadd.f32 %v602, %v366
        %v635 = vadd.f32 %v603, %v367
        %v636 = vadd.f32 %v604, %v366
        %v637 = vadd.f32 %v605, %v367
        %v638 = vadd.f32 %v606, %v366
        %v639 = vadd.f32 %v607, %v367
        %v640 = vadd.f32 %v608, %v366
        %v641 = vadd.f32 %v609, %v367
        %v642 = vadd.f32 %v610, %v366
        %v643 = vadd.f32 %v611, %v367
        %v644 = vadd.f32 %v612, %v366
        %v645 = vadd.f32 %v613, %v367
        %v646 = vmax.f32 %v614, 0.0
        %v647 = vmax.f32 %v615, 0.0
        %v648 = vmax.f32 %v616, 0.0
        %v649 = vmax.f32 %v617, 0.0
        %v650 = vmax.f32 %v618, 0.0
        %v651 = vmax.f32 %v619, 0.0
        %v652 = vmax.f32 %v620, 0.0
        %v653 = vmax.f32 %v621, 0.0
        %v654 = vmax.f32 %v622, 0.0
        %v655 = vmax.f32 %v623, 0.0
        %v656 = vmax.f32 %v624, 0.0
        %v657 = vmax.f32 %v625, 0.0
        %v658 = vmax.f32 %v626, 0.0
        %v659 = vmax.f32 %v627, 0.0
        %v660 = vmax.f32 %v628, 0.0
        %v661 = vmax.f32 %v629, 0.0
        %v662 = vmax.f32 %v630, 0.0
        %v663 = vmax.f32 %v631, 0.0
        %v664 = vmax.f32 %v632, 0.0
        %v665 = vmax.f32 %v633, 0.0
        %v666 = vmax.f32 %v634, 0.0
        %v667 = vmax.f32 %v635, 0.0
        %v668 = vmax.f32 %v636, 0.0
        %v669 = vmax.f32 %v637, 0.0
        %v670 = vmax.f32 %v638, 0.0
        %v671 = vmax.f32 %v639, 0.0
        %v672 = vmax.f32 %v640, 0.0
        %v673 = vmax.f32 %v641, 0.0
        %v674 = vmax.f32 %v642, 0.0
        %v675 = vmax.f32 %v643, 0.0
        %v676 = vmax.f32 %v644, 0.0
        %v677 = vmax.f32 %v645, 0.0
        %v678 = vsel %vm544, 1, 0
        %v679 = vsel %vm545, 1, 0
        %v680 = vsel %vm546, 1, 0
        %v681 = vsel %vm547, 1, 0
        %v682 = vsel %vm548, 1, 0
        %v683 = vsel %vm549, 1, 0
        %v684 = vsel %vm550, 1, 0
        %v685 = vsel %vm551, 1, 0
        %v686 = vsel %vm552, 1, 0
        %v687 = vsel %vm553, 1, 0
        %v688 = vsel %vm554, 1, 0
        %v689 = vsel %vm555, 1, 0
        %v690 = vsel %vm556, 1, 0
        %v691 = vsel %vm557, 1, 0
        %v692 = vsel %vm558, 1, 0
        %v693 = vsel %vm559, 1, 0
        %v694 = vsel %vm560, 1, 0
        %v695 = vsel %vm561, 1, 0
        %v696 = vsel %vm562, 1, 0
        %v697 = vsel %vm563, 1, 0
        %v698 = vsel %vm564, 1, 0
        %v699 = vsel %vm565, 1, 0
        %v700 = vsel %vm566, 1, 0
        %v701 = vsel %vm567, 1, 0
        %v702 = vsel %vm568, 1, 0
        %v703 = vsel %vm569, 1, 0
        %v704 = vsel %vm570, 1, 0
        %v705 = vsel %vm571, 1, 0
        %v706 = vsel %vm572, 1, 0
        %v707 = vsel %vm573, 1, 0
        %v708 = vsel %vm574, 1, 0
        %v709 = vsel %vm575, 1, 0
        %vm710 = vcmp.eq.s32.totalorder %v678, 1
        %vm711 = vcmp.eq.s32.totalorder %v679, 1
        %vm712 = vcmp.eq.s32.totalorder %v680, 1
        %vm713 = vcmp.eq.s32.totalorder %v681, 1
        %vm714 = vcmp.eq.s32.totalorder %v682, 1
        %vm715 = vcmp.eq.s32.totalorder %v683, 1
        %vm716 = vcmp.eq.s32.totalorder %v684, 1
        %vm717 = vcmp.eq.s32.totalorder %v685, 1
        %vm718 = vcmp.eq.s32.totalorder %v686, 1
        %vm719 = vcmp.eq.s32.totalorder %v687, 1
        %vm720 = vcmp.eq.s32.totalorder %v688, 1
        %vm721 = vcmp.eq.s32.totalorder %v689, 1
        %vm722 = vcmp.eq.s32.totalorder %v690, 1
        %vm723 = vcmp.eq.s32.totalorder %v691, 1
        %vm724 = vcmp.eq.s32.totalorder %v692, 1
        %vm725 = vcmp.eq.s32.totalorder %v693, 1
        %vm726 = vcmp.eq.s32.totalorder %v694, 1
        %vm727 = vcmp.eq.s32.totalorder %v695, 1
        %vm728 = vcmp.eq.s32.totalorder %v696, 1
        %vm729 = vcmp.eq.s32.totalorder %v697, 1
        %vm730 = vcmp.eq.s32.totalorder %v698, 1
        %vm731 = vcmp.eq.s32.totalorder %v699, 1
        %vm732 = vcmp.eq.s32.totalorder %v700, 1
        %vm733 = vcmp.eq.s32.totalorder %v701, 1
        %vm734 = vcmp.eq.s32.totalorder %v702, 1
        %vm735 = vcmp.eq.s32.totalorder %v703, 1
        %vm736 = vcmp.eq.s32.totalorder %v704, 1
        %vm737 = vcmp.eq.s32.totalorder %v705, 1
        %vm738 = vcmp.eq.s32.totalorder %v706, 1
        %vm739 = vcmp.eq.s32.totalorder %v707, 1
        %vm740 = vcmp.eq.s32.totalorder %v708, 1
        %vm741 = vcmp.eq.s32.totalorder %v709, 1
        %v742 = vsel %vm710, %v646, 0.0
        %v743 = vsel %vm711, %v647, 0.0
        %v744 = vsel %vm712, %v648, 0.0
        %v745 = vsel %vm713, %v649, 0.0
        %v746 = vsel %vm714, %v650, 0.0
        %v747 = vsel %vm715, %v651, 0.0
        %v748 = vsel %vm716, %v652, 0.0
        %v749 = vsel %vm717, %v653, 0.0
        %v750 = vsel %vm718, %v654, 0.0
        %v751 = vsel %vm719, %v655, 0.0
        %v752 = vsel %vm720, %v656, 0.0
        %v753 = vsel %vm721, %v657, 0.0
        %v754 = vsel %vm722, %v658, 0.0
        %v755 = vsel %vm723, %v659, 0.0
        %v756 = vsel %vm724, %v660, 0.0
        %v757 = vsel %vm725, %v661, 0.0
        %v758 = vsel %vm726, %v662, 0.0
        %v759 = vsel %vm727, %v663, 0.0
        %v760 = vsel %vm728, %v664, 0.0
        %v761 = vsel %vm729, %v665, 0.0
        %v762 = vsel %vm730, %v666, 0.0
        %v763 = vsel %vm731, %v667, 0.0
        %v764 = vsel %vm732, %v668, 0.0
        %v765 = vsel %vm733, %v669, 0.0
        %v766 = vsel %vm734, %v670, 0.0
        %v767 = vsel %vm735, %v671, 0.0
        %v768 = vsel %vm736, %v672, 0.0
        %v769 = vsel %vm737, %v673, 0.0
        %v770 = vsel %vm738, %v674, 0.0
        %v771 = vsel %vm739, %v675, 0.0
        %v772 = vsel %vm740, %v676, 0.0
        %v773 = vsel %vm741, %v677, 0.0
        %vm774 = vcmask 252928
        %v775 = vsel %vm774, %v742, 0.0
        %v776 = vsel %vm774, %v743, 0.0
        %v777 = vadd.f32 %v775, %v776
        %v778 = vrot.slane %v777, 4
        %v779 = vadd.f32 %v777, %v778
        %v780 = vrot.slane %v779, 2
        %v781 = vadd.f32 %v779, %v780
        %v782 = vrot.slane %v781, 1
        %v783 = vadd.f32 %v781, %v782
        %v784 = vsel %vm774, %v744, 0.0
        %v785 = vsel %vm774, %v745, 0.0
        %v786 = vadd.f32 %v784, %v785
        %v787 = vrot.slane %v786, 4
        %v788 = vadd.f32 %v786, %v787
        %v789 = vrot.slane %v788, 2
        %v790 = vadd.f32 %v788, %v789
        %v791 = vrot.slane %v790, 1
        %v792 = vadd.f32 %v790, %v791
        %v793 = vsel %vm774, %v746, 0.0
        %v794 = vsel %vm774, %v747, 0.0
        %v795 = vadd.f32 %v793, %v794
        %v796 = vrot.slane %v795, 4
        %v797 = vadd.f32 %v795, %v796
        %v798 = vrot.slane %v797, 2
        %v799 = vadd.f32 %v797, %v798
        %v800 = vrot.slane %v799, 1
        %v801 = vadd.f32 %v799, %v800
        %v802 = vsel %vm774, %v748, 0.0
        %v803 = vsel %vm774, %v749, 0.0
        %v804 = vadd.f32 %v802, %v803
        %v805 = vrot.slane %v804, 4
        %v806 = vadd.f32 %v804, %v805
        %v807 = vrot.slane %v806, 2
        %v808 = vadd.f32 %v806, %v807
        %v809 = vrot.slane %v808, 1
        %v810 = vadd.f32 %v808, %v809
        %v811 = vsel %vm774, %v750, 0.0
        %v812 = vsel %vm774, %v751, 0.0
        %v813 = vadd.f32 %v811, %v812
        %v814 = vrot.slane %v813, 4
        %v815 = vadd.f32 %v813, %v814
        %v816 = vrot.slane %v815, 2
        %v817 = vadd.f32 %v815, %v816
        %v818 = vrot.slane %v817, 1
        %v819 = vadd.f32 %v817, %v818
        %v820 = vsel %vm774, %v752, 0.0
        %v821 = vsel %vm774, %v753, 0.0
        %v822 = vadd.f32 %v820, %v821
        %v823 = vrot.slane %v822, 4
        %v824 = vadd.f32 %v822, %v823
        %v825 = vrot.slane %v824, 2
        %v826 = vadd.f32 %v824, %v825
        %v827 = vrot.slane %v826, 1
        %v828 = vadd.f32 %v826, %v827
        %v829 = vsel %vm774, %v754, 0.0
        %v830 = vsel %vm774, %v755, 0.0
        %v831 = vadd.f32 %v829, %v830
        %v832 = vrot.slane %v831, 4
        %v833 = vadd.f32 %v831, %v832
        %v834 = vrot.slane %v833, 2
        %v835 = vadd.f32 %v833, %v834
        %v836 = vrot.slane %v835, 1
        %v837 = vadd.f32 %v835, %v836
        %v838 = vsel %vm774, %v756, 0.0
        %v839 = vsel %vm774, %v757, 0.0
        %v840 = vadd.f32 %v838, %v839
        %v841 = vrot.slane %v840, 4
        %v842 = vadd.f32 %v840, %v841
        %v843 = vrot.slane %v842, 2
        %v844 = vadd.f32 %v842, %v843
        %v845 = vrot.slane %v844, 1
        %v846 = vadd.f32 %v844, %v845
        %v847 = vsel %vm774, %v758, 0.0
        %v848 = vsel %vm774, %v759, 0.0
        %v849 = vadd.f32 %v847, %v848
        %v850 = vrot.slane %v849, 4
        %v851 = vadd.f32 %v849, %v850
        %v852 = vrot.slane %v851, 2
        %v853 = vadd.f32 %v851, %v852
        %v854 = vrot.slane %v853, 1
        %v855 = vadd.f32 %v853, %v854
        %v856 = vsel %vm774, %v760, 0.0
        %v857 = vsel %vm774, %v761, 0.0
        %v858 = vadd.f32 %v856, %v857
        %v859 = vrot.slane %v858, 4
        %v860 = vadd.f32 %v858, %v859
        %v861 = vrot.slane %v860, 2
        %v862 = vadd.f32 %v860, %v861
        %v863 = vrot.slane %v862, 1
        %v864 = vadd.f32 %v862, %v863
        %v865 = vsel %vm774, %v762, 0.0
        %v866 = vsel %vm774, %v763, 0.0
        %v867 = vadd.f32 %v865, %v866
        %v868 = vrot.slane %v867, 4
        %v869 = vadd.f32 %v867, %v868
        %v870 = vrot.slane %v869, 2
        %v871 = vadd.f32 %v869, %v870
        %v872 = vrot.slane %v871, 1
        %v873 = vadd.f32 %v871, %v872
        %v874 = vsel %vm774, %v764, 0.0
        %v875 = vsel %vm774, %v765, 0.0
        %v876 = vadd.f32 %v874, %v875
        %v877 = vrot.slane %v876, 4
        %v878 = vadd.f32 %v876, %v877
        %v879 = vrot.slane %v878, 2
        %v880 = vadd.f32 %v878, %v879
        %v881 = vrot.slane %v880, 1
        %v882 = vadd.f32 %v880, %v881
        %v883 = vsel %vm774, %v766, 0.0
        %v884 = vsel %vm774, %v767, 0.0
        %v885 = vadd.f32 %v883, %v884
        %v886 = vrot.slane %v885, 4
        %v887 = vadd.f32 %v885, %v886
        %v888 = vrot.slane %v887, 2
        %v889 = vadd.f32 %v887, %v888
        %v890 = vrot.slane %v889, 1
        %v891 = vadd.f32 %v889, %v890
        %v892 = vsel %vm774, %v768, 0.0
        %v893 = vsel %vm774, %v769, 0.0
        %v894 = vadd.f32 %v892, %v893
        %v895 = vrot.slane %v894, 4
        %v896 = vadd.f32 %v894, %v895
        %v897 = vrot.slane %v896, 2
        %v898 = vadd.f32 %v896, %v897
        %v899 = vrot.slane %v898, 1
        %v900 = vadd.f32 %v898, %v899
        %v901 = vsel %vm774, %v770, 0.0
        %v902 = vsel %vm774, %v771, 0.0
        %v903 = vadd.f32 %v901, %v902
        %v904 = vrot.slane %v903, 4
        %v905 = vadd.f32 %v903, %v904
        %v906 = vrot.slane %v905, 2
        %v907 = vadd.f32 %v905, %v906
        %v908 = vrot.slane %v907, 1
        %v909 = vadd.f32 %v907, %v908
        %v910 = vsel %vm774, %v772, 0.0
        %v911 = vsel %vm774, %v773, 0.0
        %v912 = vadd.f32 %v910, %v911
        %v913 = vrot.slane %v912, 4
        %v914 = vadd.f32 %v912, %v913
        %v915 = vrot.slane %v914, 2
        %v916 = vadd.f32 %v914, %v915
        %v917 = vrot.slane %v916, 1
        %v918 = vadd.f32 %v916, %v917
        %v919 = vrcp.pop %v362
        %v920 = vmul.f32 1.0, %v919
        %v921 = vrcp.pop %v363
        %v922 = vmul.f32 1.0, %v921
        %924 = vset.pattern.permute.xlu0 0
        %925 = vperm.xlu0 %924, %v920
        %v926 = vpop.permute.xlu0 %925
        %928 = vset.pattern.permute.xlu0 0
        %929 = vperm.xlu0 %928, %v922
        %v930 = vpop.permute.xlu0 %929
        %v931 = vrot.slane %v926, 1
        %v932 = vrot.slane %v926, 2
        %v933 = vrot.slane %v926, 3
        %v934 = vrot.slane %v926, 4
        %v935 = vrot.slane %v926, 5
        %v936 = vrot.slane %v926, 6
        %v937 = vrot.slane %v926, 7
        %v938 = vrot.slane %v930, 1
        %v939 = vrot.slane %v930, 2
        %v940 = vrot.slane %v930, 3
        %v941 = vrot.slane %v930, 4
        %v942 = vrot.slane %v930, 5
        %v943 = vrot.slane %v930, 6
        %v944 = vrot.slane %v930, 7
        %v961 = vmul.f32 %v783, %v926
        %v962 = vmul.f32 %v792, %v931
        %v963 = vmul.f32 %v801, %v932
        %v964 = vmul.f32 %v810, %v933
        %v965 = vmul.f32 %v819, %v934
        %v966 = vmul.f32 %v828, %v935
        %v967 = vmul.f32 %v837, %v936
        %v968 = vmul.f32 %v846, %v937
        %v969 = vmul.f32 %v855, %v930
        %v970 = vmul.f32 %v864, %v938
        %v971 = vmul.f32 %v873, %v939
        %v972 = vmul.f32 %v882, %v940
        %v973 = vmul.f32 %v891, %v941
        %v974 = vmul.f32 %v900, %v942
        %v975 = vmul.f32 %v909, %v943
        %v976 = vmul.f32 %v918, %v944
        %v977 = vld [vmem:[#allocation5] sm:$0xff]
        %v978 = vld [vmem:[#allocation5 + $0x8] sm:$0xff]
        %v979 = vld [vmem:[#allocation5 + $0x10] sm:$0xff]
        %v980 = vld [vmem:[#allocation5 + $0x18] sm:$0x7f]
        %v981 = vld [vmem:[%s5] sm:$0x1]
        %983 = vset.pattern.permute.xlu0 0
        %984 = vperm.xlu0 %983, %v362
        %v985 = vpop.permute.xlu0 %984
        %988 = vset.pattern.permute.xlu0 0
        %989 = vperm.xlu0 %988, %v363
        %v990 = vpop.permute.xlu0 %989
        %v993 = vlaneseq
        %v994 = vshrl.u32 %v993, 7
        %v995 = vsub.s32 0, %v994
        %v996 = vrot.slane %v981, %v995
        %v998 = vmul.f32 %v985, %v996
        %v999 = vmul.f32 %v990, %v996
        %v1016 = vrot.slane %v962, 7
        %vm1017 = vcmask 1041409
        %v1018 = vsel %vm1017, %v1016, %v961
        %v1019 = vrot.slane %v963, 6
        %vm1020 = vcmask 1042434
        %v1021 = vsel %vm1020, %v1019, %v1018
        %v1022 = vrot.slane %v964, 5
        %vm1023 = vcmask 1043459
        %v1024 = vsel %vm1023, %v1022, %v1021
        %v1025 = vrot.slane %v965, 4
        %vm1026 = vcmask 1044484
        %v1027 = vsel %vm1026, %v1025, %v1024
        %v1028 = vrot.slane %v966, 3
        %vm1029 = vcmask 1045509
        %v1030 = vsel %vm1029, %v1028, %v1027
        %v1031 = vrot.slane %v967, 2
        %vm1032 = vcmask 1046534
        %v1033 = vsel %vm1032, %v1031, %v1030
        %v1034 = vrot.slane %v968, 1
        %vm1035 = vcmask 1047559
        %v1036 = vsel %vm1035, %v1034, %v1033
        %v1037 = vrot.slane %v970, 7
        %v1038 = vsel %vm1017, %v1037, %v969
        %v1039 = vrot.slane %v971, 6
        %v1040 = vsel %vm1020, %v1039, %v1038
        %v1041 = vrot.slane %v972, 5
        %v1042 = vsel %vm1023, %v1041, %v1040
        %v1043 = vrot.slane %v973, 4
        %v1044 = vsel %vm1026, %v1043, %v1042
        %v1045 = vrot.slane %v974, 3
        %v1046 = vsel %vm1029, %v1045, %v1044
        %v1047 = vrot.slane %v975, 2
        %v1048 = vsel %vm1032, %v1047, %v1046
        %v1049 = vrot.slane %v976, 1
        %v1050 = vsel %vm1035, %v1049, %v1048
        %v1051 = vsel %vm774, %v1036, 0
        %v1053 = vsel %vm774, %v1050, 0
        %vm1055 = vcmask 1046528
        %v1057 = vsel %vm1055, %v980, 0
        %1059 = vmatprep.subr.mxu0 0.0
        %1060 = vmatpush1.msra.mxu0 %v977
        %1061 = vmatprep.subr.mxu0 0.0
        %1062 = vmatpush1.msra.mxu0 %v978
        %1063 = vmatprep.subr.mxu0 0.0
        %1064 = vmatpush1.msra.mxu0 %v979
        %1065 = vmatprep.subr.mxu0 0.0
        %1066 = vmatpush1.msra.mxu0 %v1057
        %1067 = vmatprep.subr.mxu0 0.0
        %1068 = vmatpush1.msra.mxu0 0.0
        %1069 = vmatprep.subr.mxu0 0.0
        %1070 = vmatpush1.msra.mxu0 0.0
        %1071 = vmatprep.subr.mxu0 0.0
        %1072 = vmatpush1.msra.mxu0 0.0
        %1073 = vmatprep.subr.mxu0 0.0
        %1074 = vmatpush1.msra.mxu0 0.0
        %1075 = vmatprep.subr.mxu0 0.0
        %1076 = vmatpush1.msra.mxu0 0.0
        %1077 = vmatprep.subr.mxu0 0.0
        %1078 = vmatpush1.msra.mxu0 0.0
        %1079 = vmatprep.subr.mxu0 0.0
        %1080 = vmatpush1.msra.mxu0 0.0
        %1081 = vmatprep.subr.mxu0 0.0
        %1082 = vmatpush1.msra.mxu0 0.0
        %1083 = vmatprep.subr.mxu0 0.0
        %1084 = vmatpush1.msra.mxu0 0.0
        %1085 = vmatprep.subr.mxu0 0.0
        %1086 = vmatpush1.msra.mxu0 0.0
        %1087 = vmatprep.subr.mxu0 0.0
        %1088 = vmatpush1.msra.mxu0 0.0
        %1089 = vmatprep.subr.mxu0 0.0
        %1090 = vmatpush1.msra.mxu0 0.0
        %1091 = vmatprep.subr.mxu0 0.0
        %1092 = vmatpush1.msra.mxu0 0.0
        %1093 = vmatprep.subr.mxu0 0.0
        %1094 = vmatpush1.msra.mxu0 0.0
        %1095 = vmatprep.subr.mxu0 0.0
        %1096 = vmatpush1.msra.mxu0 0.0
        %1097 = vmatprep.subr.mxu0 0.0
        %1098 = vmatpush1.msra.mxu0 0.0
        %1099 = vmatprep.subr.mxu0 0.0
        %1100 = vmatpush1.msra.mxu0 0.0
        %1101 = vmatprep.subr.mxu0 0.0
        %1102 = vmatpush1.msra.mxu0 0.0
        %1103 = vmatprep.subr.mxu0 0.0
        %1104 = vmatpush1.msra.mxu0 0.0
        %1105 = vmatprep.subr.mxu0 0.0
        %1106 = vmatpush1.msra.mxu0 0.0
        %1107 = vmatprep.subr.mxu0 0.0
        %1108 = vmatpush1.msra.mxu0 0.0
        %1109 = vmatprep.subr.mxu0 0.0
        %1110 = vmatpush1.msra.mxu0 0.0
        %1111 = vmatprep.subr.mxu0 0.0
        %1112 = vmatpush1.msra.mxu0 0.0
        %1113 = vmatprep.subr.mxu0 0.0
        %1114 = vmatpush1.msra.mxu0 0.0
        %1115 = vmatprep.subr.mxu0 0.0
        %1116 = vmatpush1.msra.mxu0 0.0
        %1117 = vmatprep.subr.mxu0 0.0
        %1118 = vmatpush1.msra.mxu0 0.0
        %1119 = vmatprep.subr.mxu0 0.0
        %1120 = vmatpush1.msra.mxu0 0.0
        %1121 = vmatprep.subr.mxu0 0.0
        %1122 = vmatpush1.msra.mxu0 0.0
        %1123 = vmatprep.mubr.f32.mxu0 0.0
        %1124 = vmatmul.mubr.f32.gmra.mrb[0].mxu0 %v1051
        %v1125 = vpop.f32.mrb[0].mxu0
        %v1126 = vadd.f32 %v998, %v1125
        %v1127 = vpop.f32.mrb[0].mxu0
        %1128 = vmatprep.mubr.f32.mxu0 0.0
        %1129 = vmatmul.mubr.f32.gmra.mrb[0].mxu0 %v1053
        %v1130 = vpop.f32.mrb[0].mxu0
        %v1131 = vadd.f32 %v999, %v1130
        %v1132 = vpop.f32.mrb[0].mxu0
        %1133 = vdwg.mxu0
        %v1134 = vmax.f32 %v1126, 0.0
        %v1135 = vmax.f32 %v1131, 0.0
        %vm1136 = vcmask 261120
        %1137 = vst.msk [vmem:[%s343] sm:$0xff] %vm1136, %v1134
        %1138 = vst.msk [vmem:[%s343 + $0x8] sm:$0xff] %vm1136, %v1135
        %s1139 = sand.u32 %s191, 1
        %s1140 = scalar_lea.sflag [#allocation4], %s1139
        %s1141 = sand.u32 %s191, 1
        %s1142 = smul.addr %s1141, 16
        %s1143 = scalar_lea.vmem [#allocation7], %s1142
        // Predicated region
        $region53: #{tpu_custom_call.1} parent=43 // pred_check
          %p1144 = pneg %p201
        $region54: #{tpu_custom_call.1} parent=43 // pred_check_branch
          %1146 = sbr.rel (%p1144) target = $region56
        $region55: #{tpu_custom_call.1} parent=43 // pred_region
          %s1147 = smul.u32 2, %s29
          %s1149 = ssub.s32 256, 256
          %1150 = vsyncadd %s1140, %s1149
          %s1151 = smul.addr %s28, 2
          %s1152 = sadd.s32 %s1147, %s1151
          %s1153 = smul.addr %s1152, 128
          %s1154 = scalar_lea.hbm %s6, %s1153
          %s1155 = sshll.u32 %s1143, 4
          %s1156 = int_to_ptr.vmem [resolvable:$true] %s1155
          %1161 = dma.vmem_to_hbm [thread:$0]  %s1156, 256, %s1154, %s1140, 128, 128, 8
        $region56: #{tpu_custom_call.1} parent=43 // pred_fallthru
          _
      $region44: #{tpu_custom_call.1} parent=5 // pred_fallthru
        _
      %p1162 = scmp.le.s32.totalorder 2, %s19
      // Predicated region
      $region57: #{tpu_custom_call.1} parent=5 // pred_check
        %p1163 = pneg %p1162
      $region58: #{tpu_custom_call.1} parent=5 // pred_check_branch
        %1165 = sbr.rel (%p1163) target = $region60
      $region59: #{tpu_custom_call.1} parent=5 // pred_region
        %s1166 = ssub.s32 %s19, 2
        // Predicated region
        $region61: #{tpu_custom_call.1} parent=59 // pred_check
          %p1167 = pneg %p207
        $region62: #{tpu_custom_call.1} parent=59 // pred_check_branch
          %1169 = sbr.rel (%p1167) target = $region64
        $region63: #{tpu_custom_call.1} parent=59 // pred_region
          %s1170 = sand.u32 %s192, 1
          %s1171 = scalar_lea.sflag [#allocation4], %s1170
          %s1172 = sand.u32 %s192, 1
          %s1173 = smul.addr %s1172, 16
          %s1174 = scalar_lea.vmem [#allocation7], %s1173
          %1175 = dma.done %s1171, 256
        $region64: #{tpu_custom_call.1} parent=59 // pred_fallthru
          _
      $region60: #{tpu_custom_call.1} parent=5 // pred_fallthru
        _
    $region6: #{tpu_custom_call.1} parent=1 // loop_footer
      %s23 = sadd.s32 1, %s19
    $region7: #{tpu_custom_call.1} parent=1 // loop_footer_branch
      %18 = sbr.rel target = $region3
    $region8: #{tpu_custom_call.1} parent=1 // loop_exit
      _
    %1176 = vsyncpa [#allocation3], 1
    %s1177 = scalar_lea.sflag [#allocation3], 1
    %1178 = vsyncpa %s1177, 1
    %1179 = vsyncpa [#allocation6], 1
    %1180 = vsyncpa [#allocation4], 1
    %s1181 = scalar_lea.sflag [#allocation4], 1
    %1182 = vsyncpa %s1181, 1

</llo_original>
